<compile_context>
chip_gen: v6e
topology: v6e:2x2x1
jax: 0.10.0
libtpu: 0.0.40
codegen_flags: <defaults>
</compile_context>

<pallas_src>
import jax
import jax.numpy as jnp
from jax.experimental import pallas as pl
from jax.experimental.pallas import tpu as pltpu


def _round_up(x, m):
    return (x + m - 1) // m * m


def _layout(action_size, latent_size, full_width):
    """Row offsets (all multiples of 8) of each piece inside the packed array."""
    L, A, FW = latent_size, action_size, full_width
    off_bias = 0                              # row 0: b1, row 1: b2[:L], row 2: b2[L:]
    off_w1a = 8                               # (A, L)   action rows of fc1
    off_w1l = off_w1a + _round_up(A, 8)       # (L, L)   latent rows of fc1
    off_w2l = off_w1l + _round_up(L, 8)       # (L, L)   fc2 cols -> new_latent
    off_w2r = off_w2l + _round_up(L, 8)       # (L, FW)  fc2 cols -> reward_logits
    rows = off_w2r + _round_up(L, 8)
    cols = max(L, FW)
    return dict(bias=off_bias, w1a=off_w1a, w1l=off_w1l, w2l=off_w2l,
                w2r=off_w2r, rows=rows, cols=cols)


def pack_params(w1, b1, w2, b2, action_size, latent_size):
    """One-time packing of all weights/biases into a single kernel operand.

    w1: (A+L, L), w2: (L, L+FW) stored as (in_features, out_features);
    b1 / b2 may be 1-D (PyTorch style) or (1, out).
    """
    A, L = action_size, latent_size
    FW = w2.shape[1] - L
    lay = _layout(A, L, FW)
    b1 = jnp.asarray(b1, jnp.float32).reshape(-1)
    b2 = jnp.asarray(b2, jnp.float32).reshape(-1)
    packed = jnp.zeros((lay["rows"], lay["cols"]), jnp.float32)
    packed = packed.at[0, :L].set(b1)
    packed = packed.at[1, :L].set(b2[:L])
    packed = packed.at[2, :FW].set(b2[L:])
    packed = packed.at[lay["w1a"]:lay["w1a"] + A, :L].set(w1[:A, :])
    packed = packed.at[lay["w1l"]:lay["w1l"] + L, :L].set(w1[A:, :])
    packed = packed.at[lay["w2l"]:lay["w2l"] + L, :L].set(w2[:, :L])
    packed = packed.at[lay["w2r"]:lay["w2r"] + L, :FW].set(w2[:, L:])
    return packed


def _make_kernel(A, L, FW, lay):
    OB = lay["bias"]
    OW1A, OW1L = lay["w1a"], lay["w1l"]
    OW2L, OW2R = lay["w2l"], lay["w2r"]

    def kernel(action_ref, latent_ref, w_ref, latent_out_ref, reward_out_ref):
        a = action_ref[...]                        # (bt, A)
        lat = latent_ref[...]                      # (bt, L)

        # fc1: latent contraction on the MXU; the tiny K=A action term as
        # unrolled VPU broadcast-FMAs (co-issues with the MXU result pop).
        h = jnp.dot(lat, w_ref[OW1L:OW1L + L, :L],
                    preferred_element_type=jnp.float32)
        h = h + w_ref[OB:OB + 1, :L]               # + b1
        for i in range(A):                         # A is a static Python int
            h = h + a[:, i:i + 1] * w_ref[OW1A + i:OW1A + i + 1, :L]
        h = jnp.maximum(h, 0.0)                    # relu (VPU)

        # fc2, pre-split column-wise so each logical output is produced
        # directly from lane-0-aligned weight tiles (no post-kernel slicing).
        latent_out_ref[...] = (
            jnp.dot(h, w_ref[OW2L:OW2L + L, :L],
                    preferred_element_type=jnp.float32)
            + w_ref[OB + 1:OB + 2, :L]
        ).astype(latent_out_ref.dtype)
        reward_out_ref[...] = (
            jnp.dot(h, w_ref[OW2R:OW2R + L, :FW],
                    preferred_element_type=jnp.float32)
            + w_ref[OB + 2:OB + 3, :FW]
        ).astype(reward_out_ref.dtype)

    return kernel


# Lane-padded, double-buffered activation+output tiles cost ~4 KiB per batch
# row; capping bt at 2048 keeps them <= ~8 MiB: under v5e's 16 MiB scoped
# default and comfortably inside v7x's smaller (64 MiB physical) VMEM.
_MAX_BATCH_TILE = 2048


def _pick_batch_tile(batch):
    if batch < 16:
        return batch                               # latency regime: one grid step
    # >= 2 grid steps so the "parallel" batch axis can shard across both v7x
    # TensorCores; multiple of 8 (sublane); ragged last tile is masked.
    half = -(-batch // 2)
    return min(_round_up(half, 8), _MAX_BATCH_TILE)


def cart_dyna_forward(latent, action, packed_params, *, latent_size, full_width):
    """Fused forward using pre-packed params (see pack_params).

    Returns (new_latent (B, L), reward_logits (B, 2*support_width+1)).
    """
    B, L = latent.shape
    A = action.shape[1]
    FW = full_width
    assert L == latent_size
    lay = _layout(A, L, FW)
    assert packed_params.shape == (lay["rows"], lay["cols"])

    bt = _pick_batch_tile(B)
    grid = (pl.cdiv(B, bt),)

    batched = lambda i: (i, 0)       # activation / output tiles walk the batch axis
    resident = lambda i: (0, 0)      # packed weights stay resident across grid steps

    kernel = _make_kernel(A, L, FW, lay)

    return pl.pallas_call(
        kernel,
        out_shape=(
            jax.ShapeDtypeStruct((B, L), jnp.float32),
            jax.ShapeDtypeStruct((B, FW), jnp.float32),
        ),
        grid=grid,
        in_specs=[
            pl.BlockSpec((bt, A), batched),
            pl.BlockSpec((bt, L), batched),
            pl.BlockSpec((lay["rows"], lay["cols"]), resident),
        ],
        out_specs=(
            pl.BlockSpec((bt, L), batched),
            pl.BlockSpec((bt, FW), batched),
        ),
        compiler_params=pltpu.CompilerParams(
            # Batch axis is independent -> shards across both TCs on v7x.
            dimension_semantics=("parallel",),
            vmem_limit_bytes=32 * 1024 * 1024,
        ),
    )(action, latent, packed_params)


def init_params(key, action_size, latent_size, support_width):
    """Deterministic init mirroring nn.Linear shapes (weights as (in, out), 1-D biases)."""
    full_width = 2 * support_width + 1
    in1, out1 = action_size + latent_size, latent_size
    in2, out2 = latent_size, latent_size + full_width
    k1, k2, k3, k4 = jax.random.split(key, 4)
    bound1 = 1.0 / (in1 ** 0.5)
    bound2 = 1.0 / (in2 ** 0.5)
    w1 = jax.random.uniform(k1, (in1, out1), jnp.float32, -bound1, bound1)
    b1 = jax.random.uniform(k2, (out1,), jnp.float32, -bound1, bound1)
    w2 = jax.random.uniform(k3, (in2, out2), jnp.float32, -bound2, bound2)
    b2 = jax.random.uniform(k4, (out2,), jnp.float32, -bound2, bound2)
    return w1, b1, w2, b2


if __name__ == "__main__":
    action_size = 2
    latent_size = 32
    support_width = 10                 # full_width = 21, fc2 out = 32 + 21 = 53
    full_width = 2 * support_width + 1

    key = jax.random.PRNGKey(0)
    k_par, k_small, k_large = jax.random.split(key, 3)

    w1, b1, w2, b2 = init_params(k_par, action_size, latent_size, support_width)
    packed = pack_params(w1, b1, w2, b2, action_size, latent_size)

    def reference(latent, action):
        h = jnp.maximum(jnp.concatenate([action, latent], axis=1) @ w1 + b1, 0.0)
        out = h @ w2 + b2
        return out[:, :latent_size], out[:, latent_size:]

    # Small / latency shape (single grid step), matching the module contract.
    kl, ka = jax.random.split(k_small)
    latent = jax.random.normal(kl, (2, latent_size), jnp.float32)
    action = jax.random.normal(ka, (2, action_size), jnp.float32)
    new_latent, reward_logits = cart_dyna_forward(
        latent, action, packed, latent_size=latent_size, full_width=full_width)
    jax.block_until_ready((new_latent, reward_logits))
    ref_l, ref_r = reference(latent, action)
    assert new_latent.shape == (2, latent_size)
    assert reward_logits.shape == (2, full_width)
    assert jnp.allclose(new_latent, ref_l, atol=1e-5)
    assert jnp.allclose(reward_logits, ref_r, atol=1e-5)

    # Larger, ragged batch: exercises the cdiv grid, the masked last tile and
    # the >=2-grid-point path used for v7x TensorCore sharding.
    kl, ka = jax.random.split(k_large)
    B = 100
    latent = jax.random.normal(kl, (B, latent_size), jnp.float32)
    action = jax.random.normal(ka, (B, action_size), jnp.float32)
    new_latent, reward_logits = cart_dyna_forward(
        latent, action, packed, latent_size=latent_size, full_width=full_width)
    jax.block_until_ready((new_latent, reward_logits))
    ref_l, ref_r = reference(latent, action)
    assert new_latent.shape == (B, latent_size)
    assert reward_logits.shape == (B, full_width)
    assert jnp.allclose(new_latent, ref_l, atol=1e-4)
    assert jnp.allclose(reward_logits, ref_r, atol=1e-4)

    print("KERNEL_OK")
</pallas_src>

<mosaic_0001>
module attributes {stable_mosaic.version = 11 : i64} {
  func.func @kernel(%arg0: i32, %arg1: memref<2x2xf32, #tpu.memory_space<vmem>>, %arg2: memref<2x32xf32, #tpu.memory_space<vmem>>, %arg3: memref<112x32xf32, #tpu.memory_space<vmem>>, %arg4: memref<2x32xf32, #tpu.memory_space<vmem>>, %arg5: memref<2x21xf32, #tpu.memory_space<vmem>>) attributes {dimension_semantics = [#tpu.dimension_semantics<parallel>], iteration_bounds = array<i64: 1>, scalar_prefetch = 0 : i64, scratch_operands = 0 : i64, tpu.core_type = #tpu.core_type<tc>, window_params = [{transform_indices = @transform_0, window_bounds = array<i64: 2, 2>}, {transform_indices = @transform_1, window_bounds = array<i64: 2, 32>}, {pipeline_mode = #tpu.pipeline_mode<synchronous>, transform_indices = @transform_2, window_bounds = array<i64: 112, 32>}, {transform_indices = @transform_3, window_bounds = array<i64: 2, 32>}, {transform_indices = @transform_4, window_bounds = array<i64: 2, 21>}]} {
    %c0 = arith.constant 0 : index
    %c0_0 = arith.constant 0 : index
    %0 = vector.load %arg1[%c0, %c0_0] : memref<2x2xf32, #tpu.memory_space<vmem>>, vector<2x2xf32>
    %c0_1 = arith.constant 0 : index
    %c0_2 = arith.constant 0 : index
    %1 = vector.load %arg2[%c0_1, %c0_2] : memref<2x32xf32, #tpu.memory_space<vmem>>, vector<2x32xf32>
    %c16 = arith.constant 16 : index
    %c0_3 = arith.constant 0 : index
    %2 = vector.load %arg3[%c16, %c0_3] : memref<112x32xf32, #tpu.memory_space<vmem>>, vector<32x32xf32>
    %cst = arith.constant dense<0.000000e+00> : vector<2x32xf32>
    %3 = tpu.matmul %1, %2, %cst {dimension_numbers = #tpu.dot_dimension_numbers<[1], [0], [0], [1], [0, 0, 1, 1], [], []>} : vector<2x32xf32>, vector<32x32xf32>, vector<2x32xf32> -> vector<2x32xf32>
    %c0_4 = arith.constant 0 : index
    %c0_5 = arith.constant 0 : index
    %4 = vector.load %arg3[%c0_4, %c0_5] : memref<112x32xf32, #tpu.memory_space<vmem>>, vector<1x32xf32>
    %5 = vector.broadcast %4 : vector<1x32xf32> to vector<2x32xf32>
    %6 = arith.addf %3, %5 : vector<2x32xf32>
    %7 = vector.extract_strided_slice %0 {offsets = [0, 0], sizes = [2, 1], strides = [1, 1]} : vector<2x2xf32> to vector<2x1xf32>
    %c8 = arith.constant 8 : index
    %c0_6 = arith.constant 0 : index
    %8 = vector.load %arg3[%c8, %c0_6] : memref<112x32xf32, #tpu.memory_space<vmem>>, vector<1x32xf32>
    %9 = vector.broadcast %7 : vector<2x1xf32> to vector<2x32xf32>
    %10 = vector.broadcast %8 : vector<1x32xf32> to vector<2x32xf32>
    %11 = arith.mulf %9, %10 : vector<2x32xf32>
    %12 = arith.addf %6, %11 : vector<2x32xf32>
    %13 = vector.extract_strided_slice %0 {offsets = [0, 1], sizes = [2, 1], strides = [1, 1]} : vector<2x2xf32> to vector<2x1xf32>
    %c9 = arith.constant 9 : index
    %c0_7 = arith.constant 0 : index
    %14 = vector.load %arg3[%c9, %c0_7] : memref<112x32xf32, #tpu.memory_space<vmem>>, vector<1x32xf32>
    %15 = vector.broadcast %13 : vector<2x1xf32> to vector<2x32xf32>
    %16 = vector.broadcast %14 : vector<1x32xf32> to vector<2x32xf32>
    %17 = arith.mulf %15, %16 : vector<2x32xf32>
    %18 = arith.addf %12, %17 : vector<2x32xf32>
    %cst_8 = arith.constant 0.000000e+00 : f32
    %19 = vector.broadcast %cst_8 : f32 to vector<2x32xf32>
    %20 = arith.maximumf %18, %19 : vector<2x32xf32>
    %c48 = arith.constant 48 : index
    %c0_9 = arith.constant 0 : index
    %21 = vector.load %arg3[%c48, %c0_9] : memref<112x32xf32, #tpu.memory_space<vmem>>, vector<32x32xf32>
    %cst_10 = arith.constant dense<0.000000e+00> : vector<2x32xf32>
    %22 = tpu.matmul %20, %21, %cst_10 {dimension_numbers = #tpu.dot_dimension_numbers<[1], [0], [0], [1], [0, 0, 1, 1], [], []>} : vector<2x32xf32>, vector<32x32xf32>, vector<2x32xf32> -> vector<2x32xf32>
    %c1 = arith.constant 1 : index
    %c0_11 = arith.constant 0 : index
    %23 = vector.load %arg3[%c1, %c0_11] : memref<112x32xf32, #tpu.memory_space<vmem>>, vector<1x32xf32>
    %24 = vector.broadcast %23 : vector<1x32xf32> to vector<2x32xf32>
    %25 = arith.addf %22, %24 : vector<2x32xf32>
    %c0_12 = arith.constant 0 : index
    %c0_13 = arith.constant 0 : index
    %26 = vector.load %arg4[%c0_12, %c0_13] : memref<2x32xf32, #tpu.memory_space<vmem>>, vector<2x32xf32>
    tpu.vector_store %arg4[%c0_12, %c0_13], %25 {strides = array<i32>} : memref<2x32xf32, #tpu.memory_space<vmem>>, vector<2x32xf32>,
    %c80 = arith.constant 80 : index
    %c0_14 = arith.constant 0 : index
    %27 = vector.load %arg3[%c80, %c0_14] : memref<112x32xf32, #tpu.memory_space<vmem>>, vector<32x21xf32>
    %cst_15 = arith.constant dense<0.000000e+00> : vector<2x21xf32>
    %28 = tpu.matmul %20, %27, %cst_15 {dimension_numbers = #tpu.dot_dimension_numbers<[1], [0], [0], [1], [0, 0, 1, 1], [], []>} : vector<2x32xf32>, vector<32x21xf32>, vector<2x21xf32> -> vector<2x21xf32>
    %c2 = arith.constant 2 : index
    %c0_16 = arith.constant 0 : index
    %29 = vector.load %arg3[%c2, %c0_16] : memref<112x32xf32, #tpu.memory_space<vmem>>, vector<1x21xf32>
    %30 = vector.broadcast %29 : vector<1x21xf32> to vector<2x21xf32>
    %31 = arith.addf %28, %30 : vector<2x21xf32>
    %c0_17 = arith.constant 0 : index
    %c0_18 = arith.constant 0 : index
    %32 = vector.load %arg5[%c0_17, %c0_18] : memref<2x21xf32, #tpu.memory_space<vmem>>, vector<2x21xf32>
    tpu.vector_store %arg5[%c0_17, %c0_18], %31 {strides = array<i32>} : memref<2x21xf32, #tpu.memory_space<vmem>>, vector<2x21xf32>,
    return
  }
  func.func @transform_0(%arg0: i32) -> (i32, i32) {
    %c0_i32 = arith.constant 0 : i32
    %c0_i32_0 = arith.constant 0 : i32
    return %arg0, %c0_i32 : i32, i32
  }
  func.func @transform_1(%arg0: i32) -> (i32, i32) {
    %c0_i32 = arith.constant 0 : i32
    %c0_i32_0 = arith.constant 0 : i32
    return %arg0, %c0_i32 : i32, i32
  }
  func.func @transform_2(%arg0: i32) -> (i32, i32) {
    %c0_i32 = arith.constant 0 : i32
    %c0_i32_0 = arith.constant 0 : i32
    %c0_i32_1 = arith.constant 0 : i32
    return %c0_i32, %c0_i32_0 : i32, i32
  }
  func.func @transform_3(%arg0: i32) -> (i32, i32) {
    %c0_i32 = arith.constant 0 : i32
    %c0_i32_0 = arith.constant 0 : i32
    return %arg0, %c0_i32 : i32, i32
  }
  func.func @transform_4(%arg0: i32) -> (i32, i32) {
    %c0_i32 = arith.constant 0 : i32
    %c0_i32_0 = arith.constant 0 : i32
    return %arg0, %c0_i32 : i32, i32
  }
}

</mosaic_0001>

<llo_original>
// kernel: tpu_custom_call.1
$region0: #{tpu_custom_call.1}
  #allocation0 [shape = 'u32[]', space=smem, size = 0x4, offset = 0x4, fixed_abs, tag = 'smem constant byte address 0x4 - core index']
  #allocation1 [shape = 'u32[144,128]{1,0:T(1,128)}', space=vmem, size = 0x12000, scoped, tag = 'internal scratch']
  %s0 = inlined_call_operand.vmem [shape: f32[2,2], index: 0, kind: input, shape index: {}]
  %s1 = inlined_call_operand.vmem [shape: f32[2,32], index: 1, kind: input, shape index: {}]
  %s2 = inlined_call_operand.vmem [shape: f32[112,32], index: 2, kind: input, shape index: {}]
  %s3 = inlined_call_operand.hbm [shape: f32[2,32], index: 3, kind: output, shape index: {0}]
  %s4 = inlined_call_operand.hbm [shape: f32[2,21], index: 4, kind: output, shape index: {1}]
  %5 = xla_tuple %s3, %s4
  %s6 = sld [smem:[#allocation0]]
  $region30: #{tpu_custom_call.1} parent=0
    _
  %s8 = ssub.s32 1, %s6
  %s9 = scalar_select 0, %s8, %s6
  $region1: #{tpu_custom_call.1} parent=0
    #allocation2 [shape = 'u8[1024]{0}', space=vmem, size = 0x400, scoped, tag = 'output window, operand 0, single buffered']
    #allocation3 [shape = 's32[1]{0}', space=sflag, size = 0x4, scoped, tag = 'scoped memory for tpu_custom_call.1']
    #allocation4 [shape = 'u8[1024]{0}', space=vmem, size = 0x400, scoped, tag = 'output window, operand 1, single buffered']
    #allocation5 [shape = 's32[1]{0}', space=sflag, size = 0x4, scoped, tag = 'scoped memory for tpu_custom_call.1']
    %10 = vsyncpa [#allocation3], 0
    %11 = vsyncpa [#allocation5], 0
    // Predicated region
    $region2: #{tpu_custom_call.1} parent=1 // pred_check
      _
    $region3: #{tpu_custom_call.1} parent=1 // pred_check_branch
      %13 = sbr.rel (0) target = $region5
    $region4: #{tpu_custom_call.1} parent=1 // pred_region
      _
    $region5: #{tpu_custom_call.1} parent=1 // pred_fallthru
      _
    // Predicated region
    $region6: #{tpu_custom_call.1} parent=1 // pred_check
      _
    $region7: #{tpu_custom_call.1} parent=1 // pred_check_branch
      %15 = sbr.rel (0) target = $region9
    $region8: #{tpu_custom_call.1} parent=1 // pred_region
      _
    $region9: #{tpu_custom_call.1} parent=1 // pred_fallthru
      _
    // Predicated region
    $region10: #{tpu_custom_call.1} parent=1 // pred_check
      _
    $region11: #{tpu_custom_call.1} parent=1 // pred_check_branch
      %17 = sbr.rel (0) target = $region13
    $region12: #{tpu_custom_call.1} parent=1 // pred_region
      _
    $region13: #{tpu_custom_call.1} parent=1 // pred_fallthru
      _
    %v18 = vld [vmem:[%s0] sm:$0x3]
    %v19 = vld [vmem:[%s1] sm:$0x3]
    %v20 = vld [vmem:[%s2 + $0x10] sm:$0xff]
    %v21 = vld [vmem:[%s2 + $0x18] sm:$0xff]
    %v22 = vld [vmem:[%s2 + $0x20] sm:$0xff]
    %v23 = vld [vmem:[%s2 + $0x28] sm:$0xff]
    %v24 = vld [vmem:[%s2] sm:$0x1]
    %v25 = vlaneseq
    %v26 = vshrl.u32 %v25, 7
    %v27 = vsub.s32 0, %v26
    %v28 = vrot.slane %v24, %v27
    %vm29 = vcmask 261120
    %v31 = vsel %vm29, %v19, 0
    %33 = vmatprep.subr.mxu0 0.0
    %34 = vmatpush1.msra.mxu0 0.0
    %35 = vmatprep.subr.mxu0 0.0
    %36 = vmatpush1.msra.mxu0 0.0
    %37 = vmatprep.subr.mxu0 0.0
    %38 = vmatpush1.msra.mxu0 0.0
    %39 = vmatprep.subr.mxu0 0.0
    %40 = vmatpush1.msra.mxu0 0.0
    %41 = vmatprep.subr.mxu0 0.0
    %42 = vmatpush1.msra.mxu0 0.0
    %43 = vmatprep.subr.mxu0 0.0
    %44 = vmatpush1.msra.mxu0 0.0
    %45 = vmatprep.subr.mxu0 0.0
    %46 = vmatpush1.msra.mxu0 0.0
    %47 = vmatprep.subr.mxu0 0.0
    %48 = vmatpush1.msra.mxu0 0.0
    %49 = vmatprep.subr.mxu0 0.0
    %50 = vmatpush1.msra.mxu0 0.0
    %51 = vmatprep.subr.mxu0 0.0
    %52 = vmatpush1.msra.mxu0 0.0
    %53 = vmatprep.subr.mxu0 0.0
    %54 = vmatpush1.msra.mxu0 0.0
    %55 = vmatprep.subr.mxu0 0.0
    %56 = vmatpush1.msra.mxu0 0.0
    %57 = vmatprep.subr.mxu0 0.0
    %58 = vmatpush1.msra.mxu0 %v23
    %59 = vmatprep.subr.mxu0 0.0
    %60 = vmatpush1.msra.mxu0 %v22
    %61 = vmatprep.subr.mxu0 0.0
    %62 = vmatpush1.msra.mxu0 %v21
    %63 = vmatprep.subr.mxu0 0.0
    %64 = vmatpush1.msra.mxu0 %v20
    %65 = vmatprep.subr.mxu0 0.0
    %66 = vmatpush2.msra.mxu0 0.0
    %67 = vmatprep.subr.mxu0 0.0
    %68 = vmatpush2.msra.mxu0 0.0
    %69 = vmatprep.subr.mxu0 0.0
    %70 = vmatpush2.msra.mxu0 0.0
    %71 = vmatprep.subr.mxu0 0.0
    %72 = vmatpush2.msra.mxu0 0.0
    %73 = vmatprep.subr.mxu0 0.0
    %74 = vmatpush2.msra.mxu0 0.0
    %75 = vmatprep.subr.mxu0 0.0
    %76 = vmatpush2.msra.mxu0 0.0
    %77 = vmatprep.subr.mxu0 0.0
    %78 = vmatpush2.msra.mxu0 0.0
    %79 = vmatprep.subr.mxu0 0.0
    %80 = vmatpush2.msra.mxu0 0.0
    %81 = vmatprep.subr.mxu0 0.0
    %82 = vmatpush2.msra.mxu0 0.0
    %83 = vmatprep.subr.mxu0 0.0
    %84 = vmatpush2.msra.mxu0 0.0
    %85 = vmatprep.subr.mxu0 0.0
    %86 = vmatpush2.msra.mxu0 0.0
    %87 = vmatprep.subr.mxu0 0.0
    %88 = vmatpush2.msra.mxu0 0.0
    %89 = vmatprep.subr.mxu0 0.0
    %90 = vmatpush2.msra.mxu0 0.0
    %91 = vmatprep.subr.mxu0 0.0
    %92 = vmatpush2.msra.mxu0 0.0
    %93 = vmatprep.subr.mxu0 0.0
    %94 = vmatpush2.msra.mxu0 0.0
    %95 = vmatprep.subr.mxu0 0.0
    %96 = vmatpush2.msra.mxu0 0.0
    %97 = vmatprep.mubr.f32.mxu0 0.0
    %98 = vmatmul.mubr.f32.gmra.mxu0 %v31
    %v99 = vpop.f32.mrf.mxu0
    %v100 = vadd.f32 %v28, %v99
    %v101 = vpop.f32.mrf.mxu0
    %102 = vdwg.mxu0
    %v103 = vld [vmem:[%s2 + $0x8] sm:$0x1]
    %105 = vset.pattern.permute.xlu0 0
    %106 = vperm.xlu0 %105, %v18
    %v107 = vpop.permute.xlu0 %106
    %v109 = vlaneseq
    %v110 = vshrl.u32 %v109, 7
    %v111 = vsub.s32 0, %v110
    %v112 = vrot.slane %v103, %v111
    %v113 = vmul.f32 %v107, %v112
    %v114 = vadd.f32 %v100, %v113
    %v115 = vld [vmem:[%s2 + $0x9] sm:$0x1]
    %116 = vset.pattern.permute.xlu0 1
    %117 = vperm.xlu0 %116, %v18
    %v118 = vpop.permute.xlu0 %117
    %v120 = vlaneseq
    %v121 = vshrl.u32 %v120, 7
    %v122 = vsub.s32 0, %v121
    %v123 = vrot.slane %v115, %v122
    %v124 = vmul.f32 %v118, %v123
    %v125 = vadd.f32 %v114, %v124
    %v126 = vmax.f32 %v125, 0.0
    %v127 = vld [vmem:[%s2 + $0x30] sm:$0xff]
    %v128 = vld [vmem:[%s2 + $0x38] sm:$0xff]
    %v129 = vld [vmem:[%s2 + $0x40] sm:$0xff]
    %v130 = vld [vmem:[%s2 + $0x48] sm:$0xff]
    %v131 = vld [vmem:[%s2 + $0x1] sm:$0x1]
    %v132 = vlaneseq
    %v133 = vshrl.u32 %v132, 7
    %v134 = vsub.s32 0, %v133
    %v135 = vrot.slane %v131, %v134
    %v137 = vsel %vm29, %v126, 0
    %139 = vmatprep.subr.mxu0 0.0
    %140 = vmatpush1.msra.mxu0 0.0
    %141 = vmatprep.subr.mxu0 0.0
    %142 = vmatpush1.msra.mxu0 0.0
    %143 = vmatprep.subr.mxu0 0.0
    %144 = vmatpush1.msra.mxu0 0.0
    %145 = vmatprep.subr.mxu0 0.0
    %146 = vmatpush1.msra.mxu0 0.0
    %147 = vmatprep.subr.mxu0 0.0
    %148 = vmatpush1.msra.mxu0 0.0
    %149 = vmatprep.subr.mxu0 0.0
    %150 = vmatpush1.msra.mxu0 0.0
    %151 = vmatprep.subr.mxu0 0.0
    %152 = vmatpush1.msra.mxu0 0.0
    %153 = vmatprep.subr.mxu0 0.0
    %154 = vmatpush1.msra.mxu0 0.0
    %155 = vmatprep.subr.mxu0 0.0
    %156 = vmatpush1.msra.mxu0 0.0
    %157 = vmatprep.subr.mxu0 0.0
    %158 = vmatpush1.msra.mxu0 0.0
    %159 = vmatprep.subr.mxu0 0.0
    %160 = vmatpush1.msra.mxu0 0.0
    %161 = vmatprep.subr.mxu0 0.0
    %162 = vmatpush1.msra.mxu0 0.0
    %163 = vmatprep.subr.mxu0 0.0
    %164 = vmatpush1.msra.mxu0 %v130
    %165 = vmatprep.subr.mxu0 0.0
    %166 = vmatpush1.msra.mxu0 %v129
    %167 = vmatprep.subr.mxu0 0.0
    %168 = vmatpush1.msra.mxu0 %v128
    %169 = vmatprep.subr.mxu0 0.0
    %170 = vmatpush1.msra.mxu0 %v127
    %171 = vmatprep.subr.mxu0 0.0
    %172 = vmatpush2.msra.mxu0 0.0
    %173 = vmatprep.subr.mxu0 0.0
    %174 = vmatpush2.msra.mxu0 0.0
    %175 = vmatprep.subr.mxu0 0.0
    %176 = vmatpush2.msra.mxu0 0.0
    %177 = vmatprep.subr.mxu0 0.0
    %178 = vmatpush2.msra.mxu0 0.0
    %179 = vmatprep.subr.mxu0 0.0
    %180 = vmatpush2.msra.mxu0 0.0
    %181 = vmatprep.subr.mxu0 0.0
    %182 = vmatpush2.msra.mxu0 0.0
    %183 = vmatprep.subr.mxu0 0.0
    %184 = vmatpush2.msra.mxu0 0.0
    %185 = vmatprep.subr.mxu0 0.0
    %186 = vmatpush2.msra.mxu0 0.0
    %187 = vmatprep.subr.mxu0 0.0
    %188 = vmatpush2.msra.mxu0 0.0
    %189 = vmatprep.subr.mxu0 0.0
    %190 = vmatpush2.msra.mxu0 0.0
    %191 = vmatprep.subr.mxu0 0.0
    %192 = vmatpush2.msra.mxu0 0.0
    %193 = vmatprep.subr.mxu0 0.0
    %194 = vmatpush2.msra.mxu0 0.0
    %195 = vmatprep.subr.mxu0 0.0
    %196 = vmatpush2.msra.mxu0 0.0
    %197 = vmatprep.subr.mxu0 0.0
    %198 = vmatpush2.msra.mxu0 0.0
    %199 = vmatprep.subr.mxu0 0.0
    %200 = vmatpush2.msra.mxu0 0.0
    %201 = vmatprep.subr.mxu0 0.0
    %202 = vmatpush2.msra.mxu0 0.0
    %203 = vmatprep.mubr.f32.mxu0 0.0
    %204 = vmatmul.mubr.f32.gmra.mxu0 %v137
    %v205 = vpop.f32.mrf.mxu0
    %v206 = vadd.f32 %v135, %v205
    %v207 = vpop.f32.mrf.mxu0
    %208 = vdwg.mxu0
    %vm209 = vcmask 254976
    %210 = vst.msk [vmem:[#allocation2] sm:$0x3] %vm209, %v206
    %v211 = vld [vmem:[%s2 + $0x50] sm:$0xff]
    %v212 = vld [vmem:[%s2 + $0x58] sm:$0xff]
    %v213 = vld [vmem:[%s2 + $0x60] sm:$0xff]
    %v214 = vld [vmem:[%s2 + $0x68] sm:$0xff]
    %v215 = vld [vmem:[%s2 + $0x2] sm:$0x1]
    %v216 = vlaneseq
    %v217 = vshrl.u32 %v216, 7
    %v218 = vsub.s32 0, %v217
    %v219 = vrot.slane %v215, %v218
    %220 = vmatprep.subr.mxu0 0.0
    %221 = vmatpush1.msra.mxu0 0.0
    %222 = vmatprep.subr.mxu0 0.0
    %223 = vmatpush1.msra.mxu0 0.0
    %224 = vmatprep.subr.mxu0 0.0
    %225 = vmatpush1.msra.mxu0 0.0
    %226 = vmatprep.subr.mxu0 0.0
    %227 = vmatpush1.msra.mxu0 0.0
    %228 = vmatprep.subr.mxu0 0.0
    %229 = vmatpush1.msra.mxu0 0.0
    %230 = vmatprep.subr.mxu0 0.0
    %231 = vmatpush1.msra.mxu0 0.0
    %232 = vmatprep.subr.mxu0 0.0
    %233 = vmatpush1.msra.mxu0 0.0
    %234 = vmatprep.subr.mxu0 0.0
    %235 = vmatpush1.msra.mxu0 0.0
    %236 = vmatprep.subr.mxu0 0.0
    %237 = vmatpush1.msra.mxu0 0.0
    %238 = vmatprep.subr.mxu0 0.0
    %239 = vmatpush1.msra.mxu0 0.0
    %240 = vmatprep.subr.mxu0 0.0
    %241 = vmatpush1.msra.mxu0 0.0
    %242 = vmatprep.subr.mxu0 0.0
    %243 = vmatpush1.msra.mxu0 0.0
    %244 = vmatprep.subr.mxu0 0.0
    %245 = vmatpush1.msra.mxu0 %v214
    %246 = vmatprep.subr.mxu0 0.0
    %247 = vmatpush1.msra.mxu0 %v213
    %248 = vmatprep.subr.mxu0 0.0
    %249 = vmatpush1.msra.mxu0 %v212
    %250 = vmatprep.subr.mxu0 0.0
    %251 = vmatpush1.msra.mxu0 %v211
    %252 = vmatprep.subr.mxu0 0.0
    %253 = vmatpush2.msra.mxu0 0.0
    %254 = vmatprep.subr.mxu0 0.0
    %255 = vmatpush2.msra.mxu0 0.0
    %256 = vmatprep.subr.mxu0 0.0
    %257 = vmatpush2.msra.mxu0 0.0
    %258 = vmatprep.subr.mxu0 0.0
    %259 = vmatpush2.msra.mxu0 0.0
    %260 = vmatprep.subr.mxu0 0.0
    %261 = vmatpush2.msra.mxu0 0.0
    %262 = vmatprep.subr.mxu0 0.0
    %263 = vmatpush2.msra.mxu0 0.0
    %264 = vmatprep.subr.mxu0 0.0
    %265 = vmatpush2.msra.mxu0 0.0
    %266 = vmatprep.subr.mxu0 0.0
    %267 = vmatpush2.msra.mxu0 0.0
    %268 = vmatprep.subr.mxu0 0.0
    %269 = vmatpush2.msra.mxu0 0.0
    %270 = vmatprep.subr.mxu0 0.0
    %271 = vmatpush2.msra.mxu0 0.0
    %272 = vmatprep.subr.mxu0 0.0
    %273 = vmatpush2.msra.mxu0 0.0
    %274 = vmatprep.subr.mxu0 0.0
    %275 = vmatpush2.msra.mxu0 0.0
    %276 = vmatprep.subr.mxu0 0.0
    %277 = vmatpush2.msra.mxu0 0.0
    %278 = vmatprep.subr.mxu0 0.0
    %279 = vmatpush2.msra.mxu0 0.0
    %280 = vmatprep.subr.mxu0 0.0
    %281 = vmatpush2.msra.mxu0 0.0
    %282 = vmatprep.subr.mxu0 0.0
    %283 = vmatpush2.msra.mxu0 0.0
    %284 = vmatprep.mubr.f32.mxu0 0.0
    %285 = vmatmul.mubr.f32.gmra.mxu0 %v137
    %v286 = vpop.f32.mrf.mxu0
    %v287 = vadd.f32 %v219, %v286
    %v288 = vpop.f32.mrf.mxu0
    %289 = vdwg.mxu0
    %vm290 = vcmask 164864
    %291 = vst.msk [vmem:[#allocation4] sm:$0x3] %vm290, %v287
    // Predicated region
    $region14: #{tpu_custom_call.1} parent=1 // pred_check
      _
    $region15: #{tpu_custom_call.1} parent=1 // pred_check_branch
      %293 = sbr.rel (0) target = $region17
    $region16: #{tpu_custom_call.1} parent=1 // pred_region
      %s295 = ssub.s32 32, 32
      %296 = vsyncadd [#allocation3], %s295
      %s298 = sshll.u32 [#allocation2], 4
      %s299 = int_to_ptr.vmem [resolvable:$true] %s298
      %301 = dma.vmem_to_hbm [thread:$0]  %s299, 32, %s3, [#allocation3]
    $region17: #{tpu_custom_call.1} parent=1 // pred_fallthru
      _
    // Predicated region
    $region18: #{tpu_custom_call.1} parent=1 // pred_check
      _
    $region19: #{tpu_custom_call.1} parent=1 // pred_check_branch
      %303 = sbr.rel (0) target = $region21
    $region20: #{tpu_custom_call.1} parent=1 // pred_region
      %s305 = ssub.s32 32, 32
      %306 = vsyncadd [#allocation5], %s305
      %s308 = sshll.u32 [#allocation4], 4
      %s309 = int_to_ptr.vmem [resolvable:$true] %s308
      %311 = dma.vmem_to_hbm [thread:$0]  %s309, 32, %s4, [#allocation5]
    $region21: #{tpu_custom_call.1} parent=1 // pred_fallthru
      _
    // Predicated region
    $region22: #{tpu_custom_call.1} parent=1 // pred_check
      _
    $region23: #{tpu_custom_call.1} parent=1 // pred_check_branch
      %313 = sbr.rel (0) target = $region25
    $region24: #{tpu_custom_call.1} parent=1 // pred_region
      %314 = dma.done [#allocation3], 32
    $region25: #{tpu_custom_call.1} parent=1 // pred_fallthru
      _
    // Predicated region
    $region26: #{tpu_custom_call.1} parent=1 // pred_check
      _
    $region27: #{tpu_custom_call.1} parent=1 // pred_check_branch
      %316 = sbr.rel (0) target = $region29
    $region28: #{tpu_custom_call.1} parent=1 // pred_region
      %317 = dma.done [#allocation5], 32
    $region29: #{tpu_custom_call.1} parent=1 // pred_fallthru
      _
    %318 = vsyncpa [#allocation3], 1
    %319 = vsyncpa [#allocation5], 1

</llo_original>
